<compile_context>
chip_gen: v6e
topology: v6e:2x2x1
jax: 0.10.0
libtpu: 0.0.40
codegen_flags: <defaults>
</compile_context>

<pallas_src>
import jax
import jax.numpy as jnp
import numpy as np
from jax.experimental import pallas as pl
from jax.experimental.pallas import tpu as pltpu
from jax.scipy.linalg import block_diag


def _attention_kernel(x_ref,
                      w1_ref, b1_ref, w2_ref, b2_ref, w3_ref, b3_ref,
                      sp_ref,
                      out_ref):
    x = x_ref[...]                                   # (1, C, HW) f32
    C = x.shape[1]
    HW = x.shape[2]

    # ---- channel pooling (AdaptiveAvgPool2d(1) / AdaptiveMaxPool2d(1)) ----
    pooled_avg = jnp.sum(x, axis=-1) * (1.0 / HW)    # (1, C)
    pooled_max = jnp.max(x, axis=-1)                 # (1, C)
    pooled = jnp.concatenate([pooled_avg, pooled_max], axis=-1)   # (1, 2C)

    # ---- merged channel-attention MLP (block-diagonal weights, 3 matmuls) ----
    h = jnp.dot(pooled, w1_ref[...], preferred_element_type=jnp.float32) + b1_ref[...]
    h = jnp.dot(h, w2_ref[...], preferred_element_type=jnp.float32) + b2_ref[...]
    ca = jax.nn.sigmoid(
        jnp.dot(h, w3_ref[...], preferred_element_type=jnp.float32) + b3_ref[...])   # (1, C)

    # ---- apply channel attention, staging x1 through out_ref ----
    out_ref[...] = x * ca[:, :, None]                # (1, C, HW)
    x1 = out_ref[...]

    # ---- spatial attention: 1x1 convs pre-folded to one per-pixel affine ----
    sp_max = jnp.max(x1, axis=1)                     # (1, HW)
    sp_mean = jnp.sum(x1, axis=1) * (1.0 / C)        # (1, HW)
    s = sp_ref[0] * sp_max + sp_ref[1] * sp_mean + sp_ref[2]
    # factor 2 (identity aliases x => identity += x doubles) folded in here
    sa = 2.0 * jax.nn.sigmoid(s)                     # (1, HW)

    out_ref[...] = x1 * sa[:, None, :]


def init_params(key, C):
    """Deterministic synthetic parameters matching the module's shapes."""
    Cr = C // 8
    keys = jax.random.split(key, 7)

    def lin(k, fin, fout):
        kw, kb = jax.random.split(k)
        # stored transposed (in, out) so the kernel does v @ W + b
        w = jax.random.normal(kw, (fin, fout), jnp.float32) / np.sqrt(fin)
        b = jax.random.normal(kb, (1, fout), jnp.float32) * 0.05
        return w, b

    wa1, ba1 = lin(keys[0], C, Cr)
    wa2, ba2 = lin(keys[1], Cr, Cr)
    wa3, ba3 = lin(keys[2], Cr, C)
    wm1, bm1 = lin(keys[3], C, Cr)
    wm2, bm2 = lin(keys[4], Cr, Cr)
    wm3, bm3 = lin(keys[5], Cr, C)
    # [conv1_w_for_max, conv1_w_for_mean, conv1_b, conv2_w, conv2_b]
    sp = jax.random.normal(keys[6], (5,), jnp.float32) * 0.5
    return (wa1, ba1, wa2, ba2, wa3, ba3,
            wm1, bm1, wm2, bm2, wm3, bm3, sp)


def attention_module(x, params):
    B, C, H, W = x.shape
    HW = H * W
    x3 = x.reshape(B, C, HW).astype(jnp.float32)

    (wa1, ba1, wa2, ba2, wa3, ba3,
     wm1, bm1, wm2, bm2, wm3, bm3, sp) = params

    # Merge the avg-path / max-path MLPs into one block-diagonal chain:
    #   [avg || max] @ blkdiag(W1a,W1m) @ blkdiag(W2a,W2m) @ [W3a ; W3m]
    # == mlp_avg(avg) + mlp_max(max)
    w1 = block_diag(wa1, wm1)                        # (2C, 2Cr)
    b1 = jnp.concatenate([ba1, bm1], axis=-1)        # (1, 2Cr)
    w2 = block_diag(wa2, wm2)                        # (2Cr, 2Cr)
    b2 = jnp.concatenate([ba2, bm2], axis=-1)        # (1, 2Cr)
    w3 = jnp.concatenate([wa3, wm3], axis=0)         # (2Cr, C)
    b3 = ba3 + bm3                                   # (1, C)

    # Fold Conv2d(2,1,1) -> Conv2d(1,1,1) into one per-pixel affine:
    #   w2*(w_max*max + w_mean*mean + b1) + b2
    sp_folded = jnp.stack([sp[3] * sp[0], sp[3] * sp[1], sp[3] * sp[2] + sp[4]])

    dense = (w1, b1, w2, b2, w3, b3)

    img_spec = pl.BlockSpec((1, C, HW), lambda b: (b, 0, 0))
    dense_specs = [pl.BlockSpec(w.shape, lambda b: (0, 0)) for w in dense]
    smem_spec = pl.BlockSpec(memory_space=pltpu.MemorySpace.SMEM)

    out3 = pl.pallas_call(
        _attention_kernel,
        out_shape=jax.ShapeDtypeStruct((B, C, HW), jnp.float32),
        grid=(B,),
        in_specs=[img_spec] + dense_specs + [smem_spec],
        out_specs=img_spec,
        compiler_params=pltpu.CompilerParams(
            dimension_semantics=("parallel",),
            vmem_limit_bytes=32 * 1024 * 1024,
        ),
    )(x3, *dense, sp_folded)
    return out3.reshape(B, C, H, W)


def attention_ref(x, params):
    """Pure-JAX reference reproducing the PyTorch forward (with aliasing)."""
    wa1, ba1, wa2, ba2, wa3, ba3, wm1, bm1, wm2, bm2, wm3, bm3, sp = params
    pooled_avg = x.mean(axis=(2, 3))
    pooled_max = x.max(axis=(2, 3))

    def mlp(v, w1, b1, w2, b2, w3, b3):
        h = v @ w1 + b1
        h = h @ w2 + b2
        return h @ w3 + b3

    ca = jax.nn.sigmoid(mlp(pooled_avg, wa1, ba1, wa2, ba2, wa3, ba3)
                        + mlp(pooled_max, wm1, bm1, wm2, bm2, wm3, bm3))
    x1 = x * ca[:, :, None, None]
    s = sp[0] * x1.max(axis=1) + sp[1] * x1.mean(axis=1) + sp[2]
    s = sp[3] * s + sp[4]
    sa = jax.nn.sigmoid(s)[:, None, :, :]
    return 2.0 * x1 * sa


if __name__ == "__main__":
    key = jax.random.PRNGKey(0)
    kx, kp = jax.random.split(key)
    B, C, H, W = 2, 32, 16, 16          # in_channels=32 so in_channels//8 = 4
    x = jax.random.normal(kx, (B, C, H, W), jnp.float32)
    params = init_params(kp, C)

    out = attention_module(x, params)
    out = jax.block_until_ready(out)

    ref = attention_ref(x, params)
    assert out.shape == (B, C, H, W)
    np.testing.assert_allclose(np.asarray(out), np.asarray(ref),
                               rtol=1e-5, atol=2e-5)
    print("KERNEL_OK")
</pallas_src>

<mosaic_0001>
module attributes {stable_mosaic.version = 11 : i64} {
  func.func @_attention_kernel(%arg0: i32, %arg1: memref<1x32x256xf32, #tpu.memory_space<vmem>>, %arg2: memref<64x8xf32, #tpu.memory_space<vmem>>, %arg3: memref<1x8xf32, #tpu.memory_space<vmem>>, %arg4: memref<8x8xf32, #tpu.memory_space<vmem>>, %arg5: memref<1x8xf32, #tpu.memory_space<vmem>>, %arg6: memref<8x32xf32, #tpu.memory_space<vmem>>, %arg7: memref<1x32xf32, #tpu.memory_space<vmem>>, %arg8: memref<3xf32, #tpu.memory_space<smem>>, %arg9: memref<1x32x256xf32, #tpu.memory_space<vmem>>) attributes {dimension_semantics = [#tpu.dimension_semantics<parallel>], iteration_bounds = array<i64: 2>, scalar_prefetch = 0 : i64, scratch_operands = 0 : i64, tpu.core_type = #tpu.core_type<tc>, window_params = [{transform_indices = @transform_0, window_bounds = array<i64: 1, 32, 256>}, {pipeline_mode = #tpu.pipeline_mode<synchronous>, transform_indices = @transform_1, window_bounds = array<i64: 64, 8>}, {pipeline_mode = #tpu.pipeline_mode<synchronous>, transform_indices = @transform_2, window_bounds = array<i64: 1, 8>}, {pipeline_mode = #tpu.pipeline_mode<synchronous>, transform_indices = @transform_3, window_bounds = array<i64: 8, 8>}, {pipeline_mode = #tpu.pipeline_mode<synchronous>, transform_indices = @transform_4, window_bounds = array<i64: 1, 8>}, {pipeline_mode = #tpu.pipeline_mode<synchronous>, transform_indices = @transform_5, window_bounds = array<i64: 8, 32>}, {pipeline_mode = #tpu.pipeline_mode<synchronous>, transform_indices = @transform_6, window_bounds = array<i64: 1, 32>}, {transform_indices = @transform_7, window_bounds = array<i64: 3>}, {transform_indices = @transform_8, window_bounds = array<i64: 1, 32, 256>}]} {
    %c0 = arith.constant 0 : index
    %c0_0 = arith.constant 0 : index
    %c0_1 = arith.constant 0 : index
    %0 = vector.load %arg1[%c0, %c0_0, %c0_1] : memref<1x32x256xf32, #tpu.memory_space<vmem>>, vector<1x32x256xf32>
    %cst = arith.constant dense<0.000000e+00> : vector<1x32xf32>
    %1 = vector.multi_reduction <add>, %0, %cst [2] : vector<1x32x256xf32> to vector<1x32xf32>
    %cst_2 = arith.constant 3.906250e-03 : f32
    %2 = vector.broadcast %cst_2 : f32 to vector<1x32xf32>
    %3 = arith.mulf %1, %2 : vector<1x32xf32>
    %cst_3 = arith.constant dense<0xFF800000> : vector<1x32xf32>
    %4 = vector.multi_reduction <maximumf>, %0, %cst_3 [2] : vector<1x32x256xf32> to vector<1x32xf32>
    %5 = tpu.concatenate %3, %4 in 1 : vector<1x32xf32>, vector<1x32xf32> -> vector<1x64xf32>
    %c0_4 = arith.constant 0 : index
    %c0_5 = arith.constant 0 : index
    %6 = vector.load %arg2[%c0_4, %c0_5] : memref<64x8xf32, #tpu.memory_space<vmem>>, vector<64x8xf32>
    %cst_6 = arith.constant dense<0.000000e+00> : vector<1x8xf32>
    %7 = tpu.matmul %5, %6, %cst_6 {dimension_numbers = #tpu.dot_dimension_numbers<[1], [0], [0], [1], [0, 0, 1, 1], [], []>} : vector<1x64xf32>, vector<64x8xf32>, vector<1x8xf32> -> vector<1x8xf32>
    %c0_7 = arith.constant 0 : index
    %c0_8 = arith.constant 0 : index
    %8 = vector.load %arg3[%c0_7, %c0_8] : memref<1x8xf32, #tpu.memory_space<vmem>>, vector<1x8xf32>
    %9 = arith.addf %7, %8 : vector<1x8xf32>
    %c0_9 = arith.constant 0 : index
    %c0_10 = arith.constant 0 : index
    %10 = vector.load %arg4[%c0_9, %c0_10] : memref<8x8xf32, #tpu.memory_space<vmem>>, vector<8x8xf32>
    %cst_11 = arith.constant dense<0.000000e+00> : vector<1x8xf32>
    %11 = tpu.matmul %9, %10, %cst_11 {dimension_numbers = #tpu.dot_dimension_numbers<[1], [0], [0], [1], [0, 0, 1, 1], [], []>} : vector<1x8xf32>, vector<8x8xf32>, vector<1x8xf32> -> vector<1x8xf32>
    %c0_12 = arith.constant 0 : index
    %c0_13 = arith.constant 0 : index
    %12 = vector.load %arg5[%c0_12, %c0_13] : memref<1x8xf32, #tpu.memory_space<vmem>>, vector<1x8xf32>
    %13 = arith.addf %11, %12 : vector<1x8xf32>
    %c0_14 = arith.constant 0 : index
    %c0_15 = arith.constant 0 : index
    %14 = vector.load %arg6[%c0_14, %c0_15] : memref<8x32xf32, #tpu.memory_space<vmem>>, vector<8x32xf32>
    %cst_16 = arith.constant dense<0.000000e+00> : vector<1x32xf32>
    %15 = tpu.matmul %13, %14, %cst_16 {dimension_numbers = #tpu.dot_dimension_numbers<[1], [0], [0], [1], [0, 0, 1, 1], [], []>} : vector<1x8xf32>, vector<8x32xf32>, vector<1x32xf32> -> vector<1x32xf32>
    %c0_17 = arith.constant 0 : index
    %c0_18 = arith.constant 0 : index
    %16 = vector.load %arg7[%c0_17, %c0_18] : memref<1x32xf32, #tpu.memory_space<vmem>>, vector<1x32xf32>
    %17 = arith.addf %15, %16 : vector<1x32xf32>
    %18 = arith.negf %17 : vector<1x32xf32>
    %19 = math.exp %18 : vector<1x32xf32>
    %cst_19 = arith.constant 1.000000e+00 : f32
    %20 = vector.broadcast %cst_19 : f32 to vector<1x32xf32>
    %21 = arith.addf %20, %19 : vector<1x32xf32>
    %22 = arith.divf %20, %21 : vector<1x32xf32>
    %23 = vector.shape_cast %22 : vector<1x32xf32> to vector<1x32x1xf32>
    %24 = vector.broadcast %23 : vector<1x32x1xf32> to vector<1x32x256xf32>
    %25 = arith.mulf %0, %24 : vector<1x32x256xf32>
    %c0_20 = arith.constant 0 : index
    %c0_21 = arith.constant 0 : index
    %c0_22 = arith.constant 0 : index
    %26 = vector.load %arg9[%c0_20, %c0_21, %c0_22] : memref<1x32x256xf32, #tpu.memory_space<vmem>>, vector<1x32x256xf32>
    tpu.vector_store %arg9[%c0_20, %c0_21, %c0_22], %25 {strides = array<i32>} : memref<1x32x256xf32, #tpu.memory_space<vmem>>, vector<1x32x256xf32>,
    %c0_23 = arith.constant 0 : index
    %c0_24 = arith.constant 0 : index
    %c0_25 = arith.constant 0 : index
    %27 = vector.load %arg9[%c0_23, %c0_24, %c0_25] : memref<1x32x256xf32, #tpu.memory_space<vmem>>, vector<1x32x256xf32>
    %cst_26 = arith.constant dense<0xFF800000> : vector<1x256xf32>
    %28 = vector.multi_reduction <maximumf>, %27, %cst_26 [1] : vector<1x32x256xf32> to vector<1x256xf32>
    %cst_27 = arith.constant dense<0.000000e+00> : vector<1x256xf32>
    %29 = vector.multi_reduction <add>, %27, %cst_27 [1] : vector<1x32x256xf32> to vector<1x256xf32>
    %cst_28 = arith.constant 3.125000e-02 : f32
    %30 = vector.broadcast %cst_28 : f32 to vector<1x256xf32>
    %31 = arith.mulf %29, %30 : vector<1x256xf32>
    %c0_29 = arith.constant 0 : index
    %32 = memref.load %arg8[%c0_29] : memref<3xf32, #tpu.memory_space<smem>>
    %33 = vector.broadcast %32 : f32 to vector<1x256xf32>
    %34 = arith.mulf %33, %28 : vector<1x256xf32>
    %c1 = arith.constant 1 : index
    %35 = memref.load %arg8[%c1] : memref<3xf32, #tpu.memory_space<smem>>
    %36 = vector.broadcast %35 : f32 to vector<1x256xf32>
    %37 = arith.mulf %36, %31 : vector<1x256xf32>
    %38 = arith.addf %34, %37 : vector<1x256xf32>
    %c2 = arith.constant 2 : index
    %39 = memref.load %arg8[%c2] : memref<3xf32, #tpu.memory_space<smem>>
    %40 = vector.broadcast %39 : f32 to vector<1x256xf32>
    %41 = arith.addf %38, %40 : vector<1x256xf32>
    %42 = arith.negf %41 : vector<1x256xf32>
    %43 = math.exp %42 : vector<1x256xf32>
    %cst_30 = arith.constant 1.000000e+00 : f32
    %44 = vector.broadcast %cst_30 : f32 to vector<1x256xf32>
    %45 = arith.addf %44, %43 : vector<1x256xf32>
    %46 = arith.divf %44, %45 : vector<1x256xf32>
    %cst_31 = arith.constant 2.000000e+00 : f32
    %47 = vector.broadcast %cst_31 : f32 to vector<1x256xf32>
    %48 = arith.mulf %47, %46 : vector<1x256xf32>
    %49 = vector.shape_cast %48 : vector<1x256xf32> to vector<1x1x256xf32>
    %50 = vector.broadcast %49 : vector<1x1x256xf32> to vector<1x32x256xf32>
    %51 = arith.mulf %27, %50 : vector<1x32x256xf32>
    %c0_32 = arith.constant 0 : index
    %c0_33 = arith.constant 0 : index
    %c0_34 = arith.constant 0 : index
    %52 = vector.load %arg9[%c0_32, %c0_33, %c0_34] : memref<1x32x256xf32, #tpu.memory_space<vmem>>, vector<1x32x256xf32>
    tpu.vector_store %arg9[%c0_32, %c0_33, %c0_34], %51 {strides = array<i32>} : memref<1x32x256xf32, #tpu.memory_space<vmem>>, vector<1x32x256xf32>,
    return
  }
  func.func @transform_0(%arg0: i32) -> (i32, i32, i32) {
    %c0_i32 = arith.constant 0 : i32
    %c0_i32_0 = arith.constant 0 : i32
    %c0_i32_1 = arith.constant 0 : i32
    return %arg0, %c0_i32, %c0_i32_0 : i32, i32, i32
  }
  func.func @transform_1(%arg0: i32) -> (i32, i32) {
    %c0_i32 = arith.constant 0 : i32
    %c0_i32_0 = arith.constant 0 : i32
    %c0_i32_1 = arith.constant 0 : i32
    return %c0_i32, %c0_i32_0 : i32, i32
  }
  func.func @transform_2(%arg0: i32) -> (i32, i32) {
    %c0_i32 = arith.constant 0 : i32
    %c0_i32_0 = arith.constant 0 : i32
    %c0_i32_1 = arith.constant 0 : i32
    return %c0_i32, %c0_i32_0 : i32, i32
  }
  func.func @transform_3(%arg0: i32) -> (i32, i32) {
    %c0_i32 = arith.constant 0 : i32
    %c0_i32_0 = arith.constant 0 : i32
    %c0_i32_1 = arith.constant 0 : i32
    return %c0_i32, %c0_i32_0 : i32, i32
  }
  func.func @transform_4(%arg0: i32) -> (i32, i32) {
    %c0_i32 = arith.constant 0 : i32
    %c0_i32_0 = arith.constant 0 : i32
    %c0_i32_1 = arith.constant 0 : i32
    return %c0_i32, %c0_i32_0 : i32, i32
  }
  func.func @transform_5(%arg0: i32) -> (i32, i32) {
    %c0_i32 = arith.constant 0 : i32
    %c0_i32_0 = arith.constant 0 : i32
    %c0_i32_1 = arith.constant 0 : i32
    return %c0_i32, %c0_i32_0 : i32, i32
  }
  func.func @transform_6(%arg0: i32) -> (i32, i32) {
    %c0_i32 = arith.constant 0 : i32
    %c0_i32_0 = arith.constant 0 : i32
    %c0_i32_1 = arith.constant 0 : i32
    return %c0_i32, %c0_i32_0 : i32, i32
  }
  func.func @transform_7(%arg0: i32) -> i32 {
    %c0_i32 = arith.constant 0 : i32
    %c0_i32_0 = arith.constant 0 : i32
    return %c0_i32 : i32
  }
  func.func @transform_8(%arg0: i32) -> (i32, i32, i32) {
    %c0_i32 = arith.constant 0 : i32
    %c0_i32_0 = arith.constant 0 : i32
    %c0_i32_1 = arith.constant 0 : i32
    return %arg0, %c0_i32, %c0_i32_0 : i32, i32, i32
  }
}

</mosaic_0001>

<llo_original>
// kernel: tpu_custom_call.1
$region0: #{tpu_custom_call.1}
  #allocation0 [shape = 'u32[]', space=smem, size = 0x4, offset = 0x4, fixed_abs, tag = 'smem constant byte address 0x4 - core index']
  #allocation1 [shape = 'u32[144,128]{1,0:T(1,128)}', space=vmem, size = 0x12000, scoped, tag = 'internal scratch']
  %s0 = inlined_call_operand.hbm [shape: f32[2,32,256], index: 0, kind: input, shape index: {}]
  %s1 = inlined_call_operand.vmem [shape: f32[64,8], index: 1, kind: input, shape index: {}]
  %s2 = inlined_call_operand.vmem [shape: f32[1,8], index: 2, kind: input, shape index: {}]
  %s3 = inlined_call_operand.vmem [shape: f32[8,8], index: 3, kind: input, shape index: {}]
  %s4 = inlined_call_operand.vmem [shape: f32[1,8], index: 4, kind: input, shape index: {}]
  %s5 = inlined_call_operand.vmem [shape: f32[8,32], index: 5, kind: input, shape index: {}]
  %s6 = inlined_call_operand.vmem [shape: f32[1,32], index: 6, kind: input, shape index: {}]
  %s7 = inlined_call_operand.vmem [shape: f32[3], index: 7, kind: input, shape index: {}]
  %s8 = inlined_call_operand.hbm [shape: f32[2,32,256], index: 8, kind: output, shape index: {}]
  %s9 = sld [smem:[#allocation0]]
  $region73: #{tpu_custom_call.1} parent=0
    _
  %s11 = ssub.s32 1, %s9
  %s12 = scalar_select 0, %s11, %s9
  $region1: #{tpu_custom_call.1} parent=0
    #allocation2 [shape = 'u8[65536]{0}', space=vmem, size = 0x10000, scoped, tag = 'input window, operand 0']
    #allocation3 [shape = 's32[2]{0}', space=sflag, size = 0x8, scoped, tag = 'scoped memory for tpu_custom_call.1']
    #allocation4 [shape = 's32[2]{0}', space=sflag, size = 0x8, scoped, tag = 'scoped memory for tpu_custom_call.1']
    #allocation5 [shape = 's32[2]{0}', space=sflag, size = 0x8, scoped, tag = 'scoped memory for tpu_custom_call.1']
    #allocation6 [shape = 'u8[512]{0}', space=smem, size = 0x200, scoped, tag = 'input window, operand 7, single buffered']
    #allocation7 [shape = 'u8[65536]{0}', space=vmem, size = 0x10000, scoped, tag = 'output window, operand 0']
    %13 = vsyncpa [#allocation3], 0
    %s14 = scalar_lea.sflag [#allocation3], 1
    %15 = vsyncpa %s14, 0
    %16 = vsyncpa [#allocation5], 0
    %17 = vsyncpa [#allocation4], 0
    %s18 = scalar_lea.sflag [#allocation4], 1
    %19 = vsyncpa %s18, 0
    loop: start=0, step=1, limit=4
    $region2: #{tpu_custom_call.1} parent=1 // loop_pre_header
      _
    $region3: #{tpu_custom_call.1} parent=1 // loop_header
      %s21 = sphi 0, %s25
      %p22 = scmp.ge.s32.totalorder %s21, 4
      %s31 = sphi 0, %s33
      %s34 = sphi 0, %s31
      %s35 = sphi 0, %s34
      %s51 = sphi 0, %s35
      %s55 = sphi 0, %s55
      %s57 = sphi 0, %s55
      %s58 = sphi 0, %s57
      %s72 = sphi 0, %s58
      %s76 = sphi 0, %s76
      %s78 = sphi 0, %s76
      %s79 = sphi 0, %s78
      %s93 = sphi 0, %s79
      %s97 = sphi 0, %s97
      %s99 = sphi 0, %s97
      %s100 = sphi 0, %s99
      %s114 = sphi 0, %s100
      %s118 = sphi 0, %s118
      %s120 = sphi 0, %s118
      %s121 = sphi 0, %s120
      %s135 = sphi 0, %s121
      %s139 = sphi 0, %s139
      %s141 = sphi 0, %s139
      %s142 = sphi 0, %s141
      %s156 = sphi 0, %s142
      %s160 = sphi 0, %s160
      %s162 = sphi 0, %s160
      %s163 = sphi 0, %s162
      %s177 = sphi 0, %s163
      %s181 = sphi 0, %s181
      %s183 = sphi 0, %s181
      %s184 = sphi 0, %s183
      %s198 = sphi 0, %s184
      %s204 = sphi 0, %s206
      %s207 = sphi 0, %s204
      %s208 = sphi 0, %s207
      %s224 = sphi 0, %s208
    $region4: #{tpu_custom_call.1} parent=1 // loop_header_branch
      %24 = sbr.rel (%p22) target = $region8
    $region5: #{tpu_custom_call.1} parent=1 // loop_body
      %s26 = ssub.s32 %s21, 1
      %s27 = ssub.s32 %s21, 2
      %s28 = sadd.s32 %s21, 1
      %s29 = ssub.s32 %s21, %s28
      %p30 = scmp.eq.s32.totalorder %s29, 0
      %s32 = sadd.s32 %s31, 1
      %s33 = scalar_select %p30, %s31, %s32
      %p36 = pneg %p30
      %p37 = scmp.eq.s32.totalorder %s21, 1
      %p38 = por %p36, %p37
      %p39 = scmp.ne.s32.totalorder %s31, %s34
      %p40 = scmp.eq.s32.totalorder %s21, 0
      %p41 = por %p39, %p40
      %p42 = scmp.ne.s32.totalorder %s31, %s34
      %p43 = scmp.eq.s32.totalorder %s26, 1
      %p44 = por %p42, %p43
      %p45 = scmp.ne.s32.totalorder %s34, %s35
      %p46 = scmp.eq.s32.totalorder %s26, 0
      %p47 = por %p45, %p46
      %p48 = scmp.ne.s32.totalorder %s34, %s35
      %p49 = scmp.eq.s32.totalorder %s27, 1
      %p50 = por %p48, %p49
      %p52 = scmp.ne.s32.totalorder %s35, %s51
      %p53 = scmp.eq.s32.totalorder %s27, 0
      %p54 = por %p52, %p53
      %s56 = sadd.s32 %s55, 1
      %p59 = scmp.eq.s32.totalorder %s21, 1
      %p60 = scmp.ne.s32.totalorder %s55, %s57
      %p61 = scmp.eq.s32.totalorder %s21, 0
      %p62 = por %p60, %p61
      %p63 = scmp.ne.s32.totalorder %s55, %s57
      %p64 = scmp.eq.s32.totalorder %s26, 1
      %p65 = por %p63, %p64
      %p66 = scmp.ne.s32.totalorder %s57, %s58
      %p67 = scmp.eq.s32.totalorder %s26, 0
      %p68 = por %p66, %p67
      %p69 = scmp.ne.s32.totalorder %s57, %s58
      %p70 = scmp.eq.s32.totalorder %s27, 1
      %p71 = por %p69, %p70
      %p73 = scmp.ne.s32.totalorder %s58, %s72
      %p74 = scmp.eq.s32.totalorder %s27, 0
      %p75 = por %p73, %p74
      %s77 = sadd.s32 %s76, 1
      %p80 = scmp.eq.s32.totalorder %s21, 1
      %p81 = scmp.ne.s32.totalorder %s76, %s78
      %p82 = scmp.eq.s32.totalorder %s21, 0
      %p83 = por %p81, %p82
      %p84 = scmp.ne.s32.totalorder %s76, %s78
      %p85 = scmp.eq.s32.totalorder %s26, 1
      %p86 = por %p84, %p85
      %p87 = scmp.ne.s32.totalorder %s78, %s79
      %p88 = scmp.eq.s32.totalorder %s26, 0
      %p89 = por %p87, %p88
      %p90 = scmp.ne.s32.totalorder %s78, %s79
      %p91 = scmp.eq.s32.totalorder %s27, 1
      %p92 = por %p90, %p91
      %p94 = scmp.ne.s32.totalorder %s79, %s93
      %p95 = scmp.eq.s32.totalorder %s27, 0
      %p96 = por %p94, %p95
      %s98 = sadd.s32 %s97, 1
      %p101 = scmp.eq.s32.totalorder %s21, 1
      %p102 = scmp.ne.s32.totalorder %s97, %s99
      %p103 = scmp.eq.s32.totalorder %s21, 0
      %p104 = por %p102, %p103
      %p105 = scmp.ne.s32.totalorder %s97, %s99
      %p106 = scmp.eq.s32.totalorder %s26, 1
      %p107 = por %p105, %p106
      %p108 = scmp.ne.s32.totalorder %s99, %s100
      %p109 = scmp.eq.s32.totalorder %s26, 0
      %p110 = por %p108, %p109
      %p111 = scmp.ne.s32.totalorder %s99, %s100
      %p112 = scmp.eq.s32.totalorder %s27, 1
      %p113 = por %p111, %p112
      %p115 = scmp.ne.s32.totalorder %s100, %s114
      %p116 = scmp.eq.s32.totalorder %s27, 0
      %p117 = por %p115, %p116
      %s119 = sadd.s32 %s118, 1
      %p122 = scmp.eq.s32.totalorder %s21, 1
      %p123 = scmp.ne.s32.totalorder %s118, %s120
      %p124 = scmp.eq.s32.totalorder %s21, 0
      %p125 = por %p123, %p124
      %p126 = scmp.ne.s32.totalorder %s118, %s120
      %p127 = scmp.eq.s32.totalorder %s26, 1
      %p128 = por %p126, %p127
      %p129 = scmp.ne.s32.totalorder %s120, %s121
      %p130 = scmp.eq.s32.totalorder %s26, 0
      %p131 = por %p129, %p130
      %p132 = scmp.ne.s32.totalorder %s120, %s121
      %p133 = scmp.eq.s32.totalorder %s27, 1
      %p134 = por %p132, %p133
      %p136 = scmp.ne.s32.totalorder %s121, %s135
      %p137 = scmp.eq.s32.totalorder %s27, 0
      %p138 = por %p136, %p137
      %s140 = sadd.s32 %s139, 1
      %p143 = scmp.eq.s32.totalorder %s21, 1
      %p144 = scmp.ne.s32.totalorder %s139, %s141
      %p145 = scmp.eq.s32.totalorder %s21, 0
      %p146 = por %p144, %p145
      %p147 = scmp.ne.s32.totalorder %s139, %s141
      %p148 = scmp.eq.s32.totalorder %s26, 1
      %p149 = por %p147, %p148
      %p150 = scmp.ne.s32.totalorder %s141, %s142
      %p151 = scmp.eq.s32.totalorder %s26, 0
      %p152 = por %p150, %p151
      %p153 = scmp.ne.s32.totalorder %s141, %s142
      %p154 = scmp.eq.s32.totalorder %s27, 1
      %p155 = por %p153, %p154
      %p157 = scmp.ne.s32.totalorder %s142, %s156
      %p158 = scmp.eq.s32.totalorder %s27, 0
      %p159 = por %p157, %p158
      %s161 = sadd.s32 %s160, 1
      %p164 = scmp.eq.s32.totalorder %s21, 1
      %p165 = scmp.ne.s32.totalorder %s160, %s162
      %p166 = scmp.eq.s32.totalorder %s21, 0
      %p167 = por %p165, %p166
      %p168 = scmp.ne.s32.totalorder %s160, %s162
      %p169 = scmp.eq.s32.totalorder %s26, 1
      %p170 = por %p168, %p169
      %p171 = scmp.ne.s32.totalorder %s162, %s163
      %p172 = scmp.eq.s32.totalorder %s26, 0
      %p173 = por %p171, %p172
      %p174 = scmp.ne.s32.totalorder %s162, %s163
      %p175 = scmp.eq.s32.totalorder %s27, 1
      %p176 = por %p174, %p175
      %p178 = scmp.ne.s32.totalorder %s163, %s177
      %p179 = scmp.eq.s32.totalorder %s27, 0
      %p180 = por %p178, %p179
      %s182 = sadd.s32 %s181, 1
      %p185 = scmp.eq.s32.totalorder %s21, 1
      %p186 = scmp.ne.s32.totalorder %s181, %s183
      %p187 = scmp.eq.s32.totalorder %s21, 0
      %p188 = por %p186, %p187
      %p189 = scmp.ne.s32.totalorder %s181, %s183
      %p190 = scmp.eq.s32.totalorder %s26, 1
      %p191 = por %p189, %p190
      %p192 = scmp.ne.s32.totalorder %s183, %s184
      %p193 = scmp.eq.s32.totalorder %s26, 0
      %p194 = por %p192, %p193
      %p195 = scmp.ne.s32.totalorder %s183, %s184
      %p196 = scmp.eq.s32.totalorder %s27, 1
      %p197 = por %p195, %p196
      %p199 = scmp.ne.s32.totalorder %s184, %s198
      %p200 = scmp.eq.s32.totalorder %s27, 0
      %p201 = por %p199, %p200
      %s202 = ssub.s32 %s21, %s28
      %p203 = scmp.eq.s32.totalorder %s202, 0
      %s205 = sadd.s32 %s204, 1
      %s206 = scalar_select %p203, %s204, %s205
      %p209 = pneg %p203
      %p210 = scmp.eq.s32.totalorder %s21, 1
      %p211 = por %p209, %p210
      %p212 = scmp.ne.s32.totalorder %s204, %s207
      %p213 = scmp.eq.s32.totalorder %s21, 0
      %p214 = por %p212, %p213
      %p215 = scmp.ne.s32.totalorder %s204, %s207
      %p216 = scmp.eq.s32.totalorder %s26, 1
      %p217 = por %p215, %p216
      %p218 = scmp.ne.s32.totalorder %s207, %s208
      %p219 = scmp.eq.s32.totalorder %s26, 0
      %p220 = por %p218, %p219
      %p221 = scmp.ne.s32.totalorder %s207, %s208
      %p222 = scmp.eq.s32.totalorder %s27, 1
      %p223 = por %p221, %p222
      %p225 = scmp.ne.s32.totalorder %s208, %s224
      %p226 = scmp.eq.s32.totalorder %s27, 0
      %p227 = por %p225, %p226
      %p228 = scmp.le.s32.totalorder 1, %s21
      %p229 = scmp.lt.s32.totalorder %s21, 3
      %p230 = pnand %p228, %p229
      %p231 = pneg %p230
      // Predicated region
      $region9: #{tpu_custom_call.1} parent=5 // pred_check
        _
      $region10: #{tpu_custom_call.1} parent=5 // pred_check_branch
        %233 = sbr.rel (%p230) target = $region12
      $region11: #{tpu_custom_call.1} parent=5 // pred_region
        %s234 = ssub.s32 %s21, 1
        // Predicated region
        $region13: #{tpu_custom_call.1} parent=11 // pred_check
          %p235 = pneg %p68
        $region14: #{tpu_custom_call.1} parent=11 // pred_check_branch
          %237 = sbr.rel (%p235) target = $region16
        $region15: #{tpu_custom_call.1} parent=11 // pred_region
          _
        $region16: #{tpu_custom_call.1} parent=11 // pred_fallthru
          _
        // Predicated region
        $region17: #{tpu_custom_call.1} parent=11 // pred_check
          %p238 = pneg %p89
        $region18: #{tpu_custom_call.1} parent=11 // pred_check_branch
          %240 = sbr.rel (%p238) target = $region20
        $region19: #{tpu_custom_call.1} parent=11 // pred_region
          _
        $region20: #{tpu_custom_call.1} parent=11 // pred_fallthru
          _
        // Predicated region
        $region21: #{tpu_custom_call.1} parent=11 // pred_check
          %p241 = pneg %p110
        $region22: #{tpu_custom_call.1} parent=11 // pred_check_branch
          %243 = sbr.rel (%p241) target = $region24
        $region23: #{tpu_custom_call.1} parent=11 // pred_region
          _
        $region24: #{tpu_custom_call.1} parent=11 // pred_fallthru
          _
        // Predicated region
        $region25: #{tpu_custom_call.1} parent=11 // pred_check
          %p244 = pneg %p131
        $region26: #{tpu_custom_call.1} parent=11 // pred_check_branch
          %246 = sbr.rel (%p244) target = $region28
        $region27: #{tpu_custom_call.1} parent=11 // pred_region
          _
        $region28: #{tpu_custom_call.1} parent=11 // pred_fallthru
          _
        // Predicated region
        $region29: #{tpu_custom_call.1} parent=11 // pred_check
          %p247 = pneg %p152
        $region30: #{tpu_custom_call.1} parent=11 // pred_check_branch
          %249 = sbr.rel (%p247) target = $region32
        $region31: #{tpu_custom_call.1} parent=11 // pred_region
          _
        $region32: #{tpu_custom_call.1} parent=11 // pred_fallthru
          _
        // Predicated region
        $region33: #{tpu_custom_call.1} parent=11 // pred_check
          %p250 = pneg %p173
        $region34: #{tpu_custom_call.1} parent=11 // pred_check_branch
          %252 = sbr.rel (%p250) target = $region36
        $region35: #{tpu_custom_call.1} parent=11 // pred_region
          _
        $region36: #{tpu_custom_call.1} parent=11 // pred_fallthru
          _
        // Predicated region
        $region37: #{tpu_custom_call.1} parent=11 // pred_check
          %p253 = pneg %p194
        $region38: #{tpu_custom_call.1} parent=11 // pred_check_branch
          %255 = sbr.rel (%p253) target = $region40
        $region39: #{tpu_custom_call.1} parent=11 // pred_region
          %s257 = ssub.s32 16, 16
          %258 = vsyncadd [#allocation5], %s257
          %s260 = sshll.u32 %s7, 4
          %s261 = int_to_ptr.vmem [resolvable:$true] %s260
          %263 = dma.vmem_to_smem %s261, 16, [#allocation6], [#allocation5]
        $region40: #{tpu_custom_call.1} parent=11 // pred_fallthru
          _
      $region12: #{tpu_custom_call.1} parent=5 // pred_fallthru
        _
      %p264 = scmp.lt.s32.totalorder %s21, 2
      // Predicated region
      $region41: #{tpu_custom_call.1} parent=5 // pred_check
        %p265 = pneg %p264
      $region42: #{tpu_custom_call.1} parent=5 // pred_check_branch
        %267 = sbr.rel (%p265) target = $region44
      $region43: #{tpu_custom_call.1} parent=5 // pred_region
        // Predicated region
        $region45: #{tpu_custom_call.1} parent=43 // pred_check
          %p268 = pneg %p41
        $region46: #{tpu_custom_call.1} parent=43 // pred_check_branch
          %270 = sbr.rel (%p268) target = $region48
        $region47: #{tpu_custom_call.1} parent=43 // pred_region
          %s271 = sand.u32 %s31, 1
          %s272 = scalar_lea.sflag [#allocation3], %s271
          %s273 = sand.u32 %s31, 1
          %s274 = smul.addr %s273, 64
          %s275 = scalar_lea.vmem [#allocation2], %s274
          %s277 = ssub.s32 1024, 1024
          %278 = vsyncadd %s272, %s277
          %s279 = smul.addr %s21, 8
          %s280 = smul.addr %s279, 128
          %s281 = scalar_lea.hbm %s0, %s280
          %s282 = sshll.u32 %s275, 4
          %s283 = int_to_ptr.vmem [resolvable:$true] %s282
          %288 = dma.hbm_to_vmem [thread:$0]  %s281, 1024, %s283, %s272, 256, 256, 16
        $region48: #{tpu_custom_call.1} parent=43 // pred_fallthru
          _
      $region44: #{tpu_custom_call.1} parent=5 // pred_fallthru
        _
      %p289 = scmp.le.s32.totalorder 1, %s21
      %p290 = scmp.lt.s32.totalorder %s21, 3
      %p291 = pnand %p289, %p290
      %p292 = pneg %p291
      // Predicated region
      $region49: #{tpu_custom_call.1} parent=5 // pred_check
        _
      $region50: #{tpu_custom_call.1} parent=5 // pred_check_branch
        %294 = sbr.rel (%p291) target = $region52
      $region51: #{tpu_custom_call.1} parent=5 // pred_region
        %s295 = ssub.s32 %s21, 1
        %s296 = sand.u32 %s34, 1
        %s297 = scalar_lea.sflag [#allocation3], %s296
        %s298 = sand.u32 %s34, 1
        %s299 = smul.addr %s298, 64
        %s300 = scalar_lea.vmem [#allocation2], %s299
        // Predicated region
        $region53: #{tpu_custom_call.1} parent=51 // pred_check
          %p301 = pneg %p47
        $region54: #{tpu_custom_call.1} parent=51 // pred_check_branch
          %303 = sbr.rel (%p301) target = $region56
        $region55: #{tpu_custom_call.1} parent=51 // pred_region
          %304 = dma.done %s297, 1024
        $region56: #{tpu_custom_call.1} parent=51 // pred_fallthru
          _
        // Predicated region
        $region57: #{tpu_custom_call.1} parent=51 // pred_check
          %p305 = pneg %p194
        $region58: #{tpu_custom_call.1} parent=51 // pred_check_branch
          %307 = sbr.rel (%p305) target = $region60
        $region59: #{tpu_custom_call.1} parent=51 // pred_region
          %308 = dma.done [#allocation5], 16
        $region60: #{tpu_custom_call.1} parent=51 // pred_fallthru
          _
        %309 = sfence
        %s310 = sand.u32 %s34, 1
        %s311 = scalar_lea.sflag [#allocation3], %s310
        %s312 = sand.u32 %s34, 1
        %s313 = smul.addr %s312, 64
        %s314 = scalar_lea.vmem [#allocation2], %s313
        %p315 = pneg %p47
        %p316 = pneg %p44
        %p317 = pneg %p68
        %p318 = pneg %p65
        %p319 = pneg %p89
        %p320 = pneg %p86
        %p321 = pneg %p110
        %p322 = pneg %p107
        %p323 = pneg %p131
        %p324 = pneg %p128
        %p325 = pneg %p152
        %p326 = pneg %p149
        %p327 = pneg %p173
        %p328 = pneg %p170
        %p329 = pneg %p194
        %p330 = pneg %p191
        %p331 = pneg %p220
        %p332 = pneg %p217
        %s333 = sand.u32 %s207, 1
        %s334 = scalar_lea.sflag [#allocation4], %s333
        %s335 = sand.u32 %s207, 1
        %s336 = smul.addr %s335, 64
        %s337 = scalar_lea.vmem [#allocation7], %s336
        %v338 = vld [vmem:[%s300] sm:$0xff]
        %v339 = vld [vmem:[%s300 + $0x8] sm:$0xff]
        %v340 = vld [vmem:[%s300 + $0x10] sm:$0xff]
        %v341 = vld [vmem:[%s300 + $0x18] sm:$0xff]
        %v342 = vld [vmem:[%s300 + $0x20] sm:$0xff]
        %v343 = vld [vmem:[%s300 + $0x28] sm:$0xff]
        %v344 = vld [vmem:[%s300 + $0x30] sm:$0xff]
        %v345 = vld [vmem:[%s300 + $0x38] sm:$0xff]
        %v346 = vadd.f32 %v338, %v339
        %347 = vadd.xlane.f32.xlu0 %v346
        %v348 = vpop.xlane.xlu0 %347
        %v349 = vadd.f32 %v340, %v341
        %350 = vadd.xlane.f32.xlu0 %v349
        %v351 = vpop.xlane.xlu0 %350
        %v352 = vadd.f32 %v342, %v343
        %353 = vadd.xlane.f32.xlu0 %v352
        %v354 = vpop.xlane.xlu0 %353
        %v355 = vadd.f32 %v344, %v345
        %356 = vadd.xlane.f32.xlu0 %v355
        %v357 = vpop.xlane.xlu0 %356
        %v358 = vmul.f32 %v348, 0.00390625
        %v359 = vmul.f32 %v351, 0.00390625
        %v360 = vmul.f32 %v354, 0.00390625
        %v361 = vmul.f32 %v357, 0.00390625
        %v362 = vmax.f32 %v338, %v339
        %363 = vmax.xlane.f32.xlu0 %v362
        %v364 = vpop.xlane.xlu0 %363
        %v365 = vmax.f32 %v340, %v341
        %366 = vmax.xlane.f32.xlu0 %v365
        %v367 = vpop.xlane.xlu0 %366
        %v368 = vmax.f32 %v342, %v343
        %369 = vmax.xlane.f32.xlu0 %v368
        %v370 = vpop.xlane.xlu0 %369
        %v371 = vmax.f32 %v344, %v345
        %372 = vmax.xlane.f32.xlu0 %v371
        %v373 = vpop.xlane.xlu0 %372
        %v378 = vlaneseq
        %v379 = vand.u32 %v378, 127
        %v380 = vlaneseq
        %v381 = vshrl.u32 %v380, 7
        %v382 = vsub.s32 %v379, %v381
        %v383 = vrot.slane %v358, %v382
        %v384 = vadd.s32 %v379, 4294967288
        %v385 = vlaneseq
        %v386 = vshrl.u32 %v385, 7
        %v387 = vsub.s32 %v384, %v386
        %v388 = vrot.slane %v359, %v387
        %vm389 = vcmask 130112
        %v390 = vsel %vm389, %v388, %v383
        %v391 = vadd.s32 %v379, 4294967280
        %v392 = vlaneseq
        %v393 = vshrl.u32 %v392, 7
        %v394 = vsub.s32 %v391, %v393
        %v395 = vrot.slane %v360, %v394
        %vm396 = vcmask 195712
        %v397 = vsel %vm396, %v395, %v390
        %v398 = vadd.s32 %v379, 4294967272
        %v399 = vlaneseq
        %v400 = vshrl.u32 %v399, 7
        %v401 = vsub.s32 %v398, %v400
        %v402 = vrot.slane %v361, %v401
        %vm403 = vcmask 261312
        %v404 = vsel %vm403, %v402, %v397
        %v410 = vadd.s32 %v379, 4294967264
        %v411 = vlaneseq
        %v412 = vshrl.u32 %v411, 7
        %v413 = vsub.s32 %v410, %v412
        %v414 = vrot.slane %v364, %v413
        %v415 = vadd.s32 %v379, 4294967256
        %v416 = vlaneseq
        %v417 = vshrl.u32 %v416, 7
        %v418 = vsub.s32 %v415, %v417
        %v419 = vrot.slane %v367, %v418
        %vm420 = vcmask 392512
        %v421 = vsel %vm420, %v419, %v414
        %v422 = vadd.s32 %v379, 4294967248
        %v423 = vlaneseq
        %v424 = vshrl.u32 %v423, 7
        %v425 = vsub.s32 %v422, %v424
        %v426 = vrot.slane %v370, %v425
        %vm427 = vcmask 458112
        %v428 = vsel %vm427, %v426, %v421
        %v429 = vadd.s32 %v379, 4294967240
        %v430 = vlaneseq
        %v431 = vshrl.u32 %v430, 7
        %v432 = vsub.s32 %v429, %v431
        %v433 = vrot.slane %v373, %v432
        %vm434 = vcmask 523712
        %v435 = vsel %vm434, %v433, %v428
        %vm437 = vcmask 261120
        %v438 = vsel %vm437, %v404, %v435
        %v439 = vld [vmem:[%s1] sm:$0xff]
        %v440 = vld [vmem:[%s1 + $0x8] sm:$0xff]
        %v441 = vld [vmem:[%s1 + $0x10] sm:$0xff]
        %v442 = vld [vmem:[%s1 + $0x18] sm:$0xff]
        %v443 = vld [vmem:[%s1 + $0x20] sm:$0xff]
        %v444 = vld [vmem:[%s1 + $0x28] sm:$0xff]
        %v445 = vld [vmem:[%s1 + $0x30] sm:$0xff]
        %v446 = vld [vmem:[%s1 + $0x38] sm:$0xff]
        %v447 = vld [vmem:[%s2] sm:$0x1]
        %vm448 = vcmask 523264
        %v450 = vsel %vm448, %v438, 0
        %452 = vmatprep.subr.mxu0 0.0
        %453 = vmatpush1.msra.mxu0 0.0
        %454 = vmatprep.subr.mxu0 0.0
        %455 = vmatpush1.msra.mxu0 0.0
        %456 = vmatprep.subr.mxu0 0.0
        %457 = vmatpush1.msra.mxu0 0.0
        %458 = vmatprep.subr.mxu0 0.0
        %459 = vmatpush1.msra.mxu0 0.0
        %460 = vmatprep.subr.mxu0 0.0
        %461 = vmatpush1.msra.mxu0 0.0
        %462 = vmatprep.subr.mxu0 0.0
        %463 = vmatpush1.msra.mxu0 0.0
        %464 = vmatprep.subr.mxu0 0.0
        %465 = vmatpush1.msra.mxu0 0.0
        %466 = vmatprep.subr.mxu0 0.0
        %467 = vmatpush1.msra.mxu0 0.0
        %468 = vmatprep.subr.mxu0 0.0
        %469 = vmatpush1.msra.mxu0 %v446
        %470 = vmatprep.subr.mxu0 0.0
        %471 = vmatpush1.msra.mxu0 %v445
        %472 = vmatprep.subr.mxu0 0.0
        %473 = vmatpush1.msra.mxu0 %v444
        %474 = vmatprep.subr.mxu0 0.0
        %475 = vmatpush1.msra.mxu0 %v443
        %476 = vmatprep.subr.mxu0 0.0
        %477 = vmatpush1.msra.mxu0 %v442
        %478 = vmatprep.subr.mxu0 0.0
        %479 = vmatpush1.msra.mxu0 %v441
        %480 = vmatprep.subr.mxu0 0.0
        %481 = vmatpush1.msra.mxu0 %v440
        %482 = vmatprep.subr.mxu0 0.0
        %483 = vmatpush1.msra.mxu0 %v439
        %484 = vmatprep.subr.mxu0 0.0
        %485 = vmatpush2.msra.mxu0 0.0
        %486 = vmatprep.subr.mxu0 0.0
        %487 = vmatpush2.msra.mxu0 0.0
        %488 = vmatprep.subr.mxu0 0.0
        %489 = vmatpush2.msra.mxu0 0.0
        %490 = vmatprep.subr.mxu0 0.0
        %491 = vmatpush2.msra.mxu0 0.0
        %492 = vmatprep.subr.mxu0 0.0
        %493 = vmatpush2.msra.mxu0 0.0
        %494 = vmatprep.subr.mxu0 0.0
        %495 = vmatpush2.msra.mxu0 0.0
        %496 = vmatprep.subr.mxu0 0.0
        %497 = vmatpush2.msra.mxu0 0.0
        %498 = vmatprep.subr.mxu0 0.0
        %499 = vmatpush2.msra.mxu0 0.0
        %500 = vmatprep.subr.mxu0 0.0
        %501 = vmatpush2.msra.mxu0 0.0
        %502 = vmatprep.subr.mxu0 0.0
        %503 = vmatpush2.msra.mxu0 0.0
        %504 = vmatprep.subr.mxu0 0.0
        %505 = vmatpush2.msra.mxu0 0.0
        %506 = vmatprep.subr.mxu0 0.0
        %507 = vmatpush2.msra.mxu0 0.0
        %508 = vmatprep.subr.mxu0 0.0
        %509 = vmatpush2.msra.mxu0 0.0
        %510 = vmatprep.subr.mxu0 0.0
        %511 = vmatpush2.msra.mxu0 0.0
        %512 = vmatprep.subr.mxu0 0.0
        %513 = vmatpush2.msra.mxu0 0.0
        %514 = vmatprep.subr.mxu0 0.0
        %515 = vmatpush2.msra.mxu0 0.0
        %516 = vmatprep.mubr.f32.mxu0 0.0
        %517 = vmatmul.mubr.f32.gmra.mxu0 %v450
        %v518 = vpop.f32.mrf.mxu0
        %v519 = vadd.f32 %v447, %v518
        %v520 = vpop.f32.mrf.mxu0
        %521 = vdwg.mxu0
        %v522 = vld [vmem:[%s3] sm:$0xff]
        %v523 = vld [vmem:[%s4] sm:$0x1]
        %vm524 = vcmask 64512
        %v526 = vsel %vm524, %v519, 0
        %528 = vmatprep.subr.mxu0 0.0
        %529 = vmatpush1.msra.mxu0 0.0
        %530 = vmatprep.subr.mxu0 0.0
        %531 = vmatpush1.msra.mxu0 0.0
        %532 = vmatprep.subr.mxu0 0.0
        %533 = vmatpush1.msra.mxu0 0.0
        %534 = vmatprep.subr.mxu0 0.0
        %535 = vmatpush1.msra.mxu0 0.0
        %536 = vmatprep.subr.mxu0 0.0
        %537 = vmatpush1.msra.mxu0 0.0
        %538 = vmatprep.subr.mxu0 0.0
        %539 = vmatpush1.msra.mxu0 0.0
        %540 = vmatprep.subr.mxu0 0.0
        %541 = vmatpush1.msra.mxu0 0.0
        %542 = vmatprep.subr.mxu0 0.0
        %543 = vmatpush1.msra.mxu0 0.0
        %544 = vmatprep.subr.mxu0 0.0
        %545 = vmatpush1.msra.mxu0 0.0
        %546 = vmatprep.subr.mxu0 0.0
        %547 = vmatpush1.msra.mxu0 0.0
        %548 = vmatprep.subr.mxu0 0.0
        %549 = vmatpush1.msra.mxu0 0.0
        %550 = vmatprep.subr.mxu0 0.0
        %551 = vmatpush1.msra.mxu0 0.0
        %552 = vmatprep.subr.mxu0 0.0
        %553 = vmatpush1.msra.mxu0 0.0
        %554 = vmatprep.subr.mxu0 0.0
        %555 = vmatpush1.msra.mxu0 0.0
        %556 = vmatprep.subr.mxu0 0.0
        %557 = vmatpush1.msra.mxu0 0.0
        %558 = vmatprep.subr.mxu0 0.0
        %559 = vmatpush1.msra.mxu0 %v522
        %560 = vmatprep.subr.mxu0 0.0
        %561 = vmatpush2.msra.mxu0 0.0
        %562 = vmatprep.subr.mxu0 0.0
        %563 = vmatpush2.msra.mxu0 0.0
        %564 = vmatprep.subr.mxu0 0.0
        %565 = vmatpush2.msra.mxu0 0.0
        %566 = vmatprep.subr.mxu0 0.0
        %567 = vmatpush2.msra.mxu0 0.0
        %568 = vmatprep.subr.mxu0 0.0
        %569 = vmatpush2.msra.mxu0 0.0
        %570 = vmatprep.subr.mxu0 0.0
        %571 = vmatpush2.msra.mxu0 0.0
        %572 = vmatprep.subr.mxu0 0.0
        %573 = vmatpush2.msra.mxu0 0.0
        %574 = vmatprep.subr.mxu0 0.0
        %575 = vmatpush2.msra.mxu0 0.0
        %576 = vmatprep.subr.mxu0 0.0
        %577 = vmatpush2.msra.mxu0 0.0
        %578 = vmatprep.subr.mxu0 0.0
        %579 = vmatpush2.msra.mxu0 0.0
        %580 = vmatprep.subr.mxu0 0.0
        %581 = vmatpush2.msra.mxu0 0.0
        %582 = vmatprep.subr.mxu0 0.0
        %583 = vmatpush2.msra.mxu0 0.0
        %584 = vmatprep.subr.mxu0 0.0
        %585 = vmatpush2.msra.mxu0 0.0
        %586 = vmatprep.subr.mxu0 0.0
        %587 = vmatpush2.msra.mxu0 0.0
        %588 = vmatprep.subr.mxu0 0.0
        %589 = vmatpush2.msra.mxu0 0.0
        %590 = vmatprep.subr.mxu0 0.0
        %591 = vmatpush2.msra.mxu0 0.0
        %592 = vmatprep.mubr.f32.mxu0 0.0
        %593 = vmatmul.mubr.f32.gmra.mxu0 %v526
        %v594 = vpop.f32.mrf.mxu0
        %v595 = vadd.f32 %v523, %v594
        %v596 = vpop.f32.mrf.mxu0
        %597 = vdwg.mxu0
        %v598 = vld [vmem:[%s5] sm:$0xff]
        %v599 = vld [vmem:[%s6] sm:$0x1]
        %v601 = vsel %vm524, %v595, 0
        %603 = vmatprep.subr.mxu0 0.0
        %604 = vmatpush1.msra.mxu0 0.0
        %605 = vmatprep.subr.mxu0 0.0
        %606 = vmatpush1.msra.mxu0 0.0
        %607 = vmatprep.subr.mxu0 0.0
        %608 = vmatpush1.msra.mxu0 0.0
        %609 = vmatprep.subr.mxu0 0.0
        %610 = vmatpush1.msra.mxu0 0.0
        %611 = vmatprep.subr.mxu0 0.0
        %612 = vmatpush1.msra.mxu0 0.0
        %613 = vmatprep.subr.mxu0 0.0
        %614 = vmatpush1.msra.mxu0 0.0
        %615 = vmatprep.subr.mxu0 0.0
        %616 = vmatpush1.msra.mxu0 0.0
        %617 = vmatprep.subr.mxu0 0.0
        %618 = vmatpush1.msra.mxu0 0.0
        %619 = vmatprep.subr.mxu0 0.0
        %620 = vmatpush1.msra.mxu0 0.0
        %621 = vmatprep.subr.mxu0 0.0
        %622 = vmatpush1.msra.mxu0 0.0
        %623 = vmatprep.subr.mxu0 0.0
        %624 = vmatpush1.msra.mxu0 0.0
        %625 = vmatprep.subr.mxu0 0.0
        %626 = vmatpush1.msra.mxu0 0.0
        %627 = vmatprep.subr.mxu0 0.0
        %628 = vmatpush1.msra.mxu0 0.0
        %629 = vmatprep.subr.mxu0 0.0
        %630 = vmatpush1.msra.mxu0 0.0
        %631 = vmatprep.subr.mxu0 0.0
        %632 = vmatpush1.msra.mxu0 0.0
        %633 = vmatprep.subr.mxu0 0.0
        %634 = vmatpush1.msra.mxu0 %v598
        %635 = vmatprep.subr.mxu0 0.0
        %636 = vmatpush2.msra.mxu0 0.0
        %637 = vmatprep.subr.mxu0 0.0
        %638 = vmatpush2.msra.mxu0 0.0
        %639 = vmatprep.subr.mxu0 0.0
        %640 = vmatpush2.msra.mxu0 0.0
        %641 = vmatprep.subr.mxu0 0.0
        %642 = vmatpush2.msra.mxu0 0.0
        %643 = vmatprep.subr.mxu0 0.0
        %644 = vmatpush2.msra.mxu0 0.0
        %645 = vmatprep.subr.mxu0 0.0
        %646 = vmatpush2.msra.mxu0 0.0
        %647 = vmatprep.subr.mxu0 0.0
        %648 = vmatpush2.msra.mxu0 0.0
        %649 = vmatprep.subr.mxu0 0.0
        %650 = vmatpush2.msra.mxu0 0.0
        %651 = vmatprep.subr.mxu0 0.0
        %652 = vmatpush2.msra.mxu0 0.0
        %653 = vmatprep.subr.mxu0 0.0
        %654 = vmatpush2.msra.mxu0 0.0
        %655 = vmatprep.subr.mxu0 0.0
        %656 = vmatpush2.msra.mxu0 0.0
        %657 = vmatprep.subr.mxu0 0.0
        %658 = vmatpush2.msra.mxu0 0.0
        %659 = vmatprep.subr.mxu0 0.0
        %660 = vmatpush2.msra.mxu0 0.0
        %661 = vmatprep.subr.mxu0 0.0
        %662 = vmatpush2.msra.mxu0 0.0
        %663 = vmatprep.subr.mxu0 0.0
        %664 = vmatpush2.msra.mxu0 0.0
        %665 = vmatprep.subr.mxu0 0.0
        %666 = vmatpush2.msra.mxu0 0.0
        %667 = vmatprep.mubr.f32.mxu0 0.0
        %668 = vmatmul.mubr.f32.gmra.mxu0 %v601
        %v669 = vpop.f32.mrf.mxu0
        %v670 = vadd.f32 %v599, %v669
        %v671 = vpop.f32.mrf.mxu0
        %672 = vdwg.mxu0
        %v673 = vxor.u32 %v670, 2147483648
        %v674 = vmul.f32 %v673, 1.442695
        %v675 = vpow.pop %v674
        %v676 = vadd.f32 %v675, 1.0
        %v677 = vrcp.pop %v676
        %v678 = vmul.f32 1.0, %v677
        %v679 = vlaneseq
        %v680 = vshrl.u32 %v679, 7
        %v681 = vsub.s32 0, %v680
        %v682 = vrot.slane %v678, %v681
        %684 = vbcast.lane.b32.xlu0 %v682, 256
        %v685 = vpop.permute.xlu0 %684
        %s687 = sor.u32 256, 8
        %688 = vbcast.lane.b32.xlu0 %v682, %s687
        %v689 = vpop.permute.xlu0 %688
        %s691 = sor.u32 256, 16
        %692 = vbcast.lane.b32.xlu0 %v682, %s691
        %v693 = vpop.permute.xlu0 %692
        %s695 = sor.u32 256, 24
        %696 = vbcast.lane.b32.xlu0 %v682, %s695
        %v697 = vpop.permute.xlu0 %696
        %v698 = vmul.f32 %v338, %v685
        %v699 = vmul.f32 %v339, %v685
        %v700 = vmul.f32 %v340, %v689
        %v701 = vmul.f32 %v341, %v689
        %v702 = vmul.f32 %v342, %v693
        %v703 = vmul.f32 %v343, %v693
        %v704 = vmul.f32 %v344, %v697
        %v705 = vmul.f32 %v345, %v697
        %706 = vst [vmem:[%s337] sm:$0xff] %v698
        %707 = vst [vmem:[%s337 + $0x8] sm:$0xff] %v699
        %708 = vst [vmem:[%s337 + $0x10] sm:$0xff] %v700
        %709 = vst [vmem:[%s337 + $0x18] sm:$0xff] %v701
        %710 = vst [vmem:[%s337 + $0x20] sm:$0xff] %v702
        %711 = vst [vmem:[%s337 + $0x28] sm:$0xff] %v703
        %712 = vst [vmem:[%s337 + $0x30] sm:$0xff] %v704
        %713 = vst [vmem:[%s337 + $0x38] sm:$0xff] %v705
        %v714 = vld [vmem:[%s337] sm:$0xff]
        %v715 = vld [vmem:[%s337 + $0x8] sm:$0xff]
        %v716 = vld [vmem:[%s337 + $0x10] sm:$0xff]
        %v717 = vld [vmem:[%s337 + $0x18] sm:$0xff]
        %v718 = vld [vmem:[%s337 + $0x20] sm:$0xff]
        %v719 = vld [vmem:[%s337 + $0x28] sm:$0xff]
        %v720 = vld [vmem:[%s337 + $0x30] sm:$0xff]
        %v721 = vld [vmem:[%s337 + $0x38] sm:$0xff]
        %v722 = vmax.f32 %v714, %v718
        %v723 = vmax.f32 %v716, %v720
        %v724 = vmax.f32 %v722, %v723
        %v725 = vrot.slane %v724, 4
        %v726 = vmax.f32 %v724, %v725
        %v727 = vrot.slane %v726, 2
        %v728 = vmax.f32 %v726, %v727
        %v729 = vrot.slane %v728, 1
        %v730 = vmax.f32 %v728, %v729
        %v731 = vmax.f32 %v715, %v719
        %v732 = vmax.f32 %v717, %v721
        %v733 = vmax.f32 %v731, %v732
        %v734 = vrot.slane %v733, 4
        %v735 = vmax.f32 %v733, %v734
        %v736 = vrot.slane %v735, 2
        %v737 = vmax.f32 %v735, %v736
        %v738 = vrot.slane %v737, 1
        %v739 = vmax.f32 %v737, %v738
        %v740 = vadd.f32 %v714, %v716
        %v741 = vadd.f32 %v740, %v718
        %v742 = vadd.f32 %v741, %v720
        %v743 = vrot.slane %v742, 4
        %v744 = vadd.f32 %v742, %v743
        %v745 = vrot.slane %v744, 2
        %v746 = vadd.f32 %v744, %v745
        %v747 = vrot.slane %v746, 1
        %v748 = vadd.f32 %v746, %v747
        %v749 = vadd.f32 %v715, %v717
        %v750 = vadd.f32 %v749, %v719
        %v751 = vadd.f32 %v750, %v721
        %v752 = vrot.slane %v751, 4
        %v753 = vadd.f32 %v751, %v752
        %v754 = vrot.slane %v753, 2
        %v755 = vadd.f32 %v753, %v754
        %v756 = vrot.slane %v755, 1
        %v757 = vadd.f32 %v755, %v756
        %v758 = vmul.f32 %v748, 0.03125
        %v759 = vmul.f32 %v757, 0.03125
        %s760 = sld [smem:[#allocation6]]
        %v761 = vstv %s760
        %v762 = vmul.f32 %v761, %v730
        %v763 = vmul.f32 %v761, %v739
        %s764 = sld [smem:[#allocation6 + $0x1]]
        %v765 = vstv %s764
        %v766 = vmul.f32 %v765, %v758
        %v767 = vmul.f32 %v765, %v759
        %v768 = vadd.f32 %v762, %v766
        %v769 = vadd.f32 %v763, %v767
        %s770 = sld [smem:[#allocation6 + $0x2]]
        %v771 = vstv %s770
        %v772 = vadd.f32 %v768, %v771
        %v773 = vadd.f32 %v769, %v771
        %v774 = vxor.u32 %v772, 2147483648
        %v775 = vxor.u32 %v773, 2147483648
        %v776 = vmul.f32 %v774, 1.442695
        %v777 = vpow.pop %v776
        %v778 = vmul.f32 %v775, 1.442695
        %v779 = vpow.pop %v778
        %v780 = vadd.f32 %v777, 1.0
        %v781 = vadd.f32 %v779, 1.0
        %v782 = vrcp.pop %v780
        %v783 = vmul.f32 1.0, %v782
        %v784 = vrcp.pop %v781
        %v785 = vmul.f32 1.0, %v784
        %v786 = vmul.f32 %v783, 2.0
        %v787 = vmul.f32 %v785, 2.0
        %v788 = vmul.f32 %v714, %v786
        %v789 = vmul.f32 %v715, %v787
        %v790 = vmul.f32 %v716, %v786
        %v791 = vmul.f32 %v717, %v787
        %v792 = vmul.f32 %v718, %v786
        %v793 = vmul.f32 %v719, %v787
        %v794 = vmul.f32 %v720, %v786
        %v795 = vmul.f32 %v721, %v787
        %796 = vst [vmem:[%s337] sm:$0xff] %v788
        %797 = vst [vmem:[%s337 + $0x8] sm:$0xff] %v789
        %798 = vst [vmem:[%s337 + $0x10] sm:$0xff] %v790
        %799 = vst [vmem:[%s337 + $0x18] sm:$0xff] %v791
        %800 = vst [vmem:[%s337 + $0x20] sm:$0xff] %v792
        %801 = vst [vmem:[%s337 + $0x28] sm:$0xff] %v793
        %802 = vst [vmem:[%s337 + $0x30] sm:$0xff] %v794
        %803 = vst [vmem:[%s337 + $0x38] sm:$0xff] %v795
        %s804 = sand.u32 %s207, 1
        %s805 = scalar_lea.sflag [#allocation4], %s804
        %s806 = sand.u32 %s207, 1
        %s807 = smul.addr %s806, 64
        %s808 = scalar_lea.vmem [#allocation7], %s807
        // Predicated region
        $region61: #{tpu_custom_call.1} parent=51 // pred_check
          %p809 = pneg %p217
        $region62: #{tpu_custom_call.1} parent=51 // pred_check_branch
          %811 = sbr.rel (%p809) target = $region64
        $region63: #{tpu_custom_call.1} parent=51 // pred_region
          %s813 = ssub.s32 1024, 1024
          %814 = vsyncadd %s805, %s813
          %s815 = smul.addr %s26, 8
          %s816 = smul.addr %s815, 128
          %s817 = scalar_lea.hbm %s8, %s816
          %s818 = sshll.u32 %s808, 4
          %s819 = int_to_ptr.vmem [resolvable:$true] %s818
          %824 = dma.vmem_to_hbm [thread:$0]  %s819, 1024, %s817, %s805, 256, 256, 16
        $region64: #{tpu_custom_call.1} parent=51 // pred_fallthru
          _
      $region52: #{tpu_custom_call.1} parent=5 // pred_fallthru
        _
      %p825 = scmp.le.s32.totalorder 2, %s21
      // Predicated region
      $region65: #{tpu_custom_call.1} parent=5 // pred_check
        %p826 = pneg %p825
      $region66: #{tpu_custom_call.1} parent=5 // pred_check_branch
        %828 = sbr.rel (%p826) target = $region68
      $region67: #{tpu_custom_call.1} parent=5 // pred_region
        %s829 = ssub.s32 %s21, 2
        // Predicated region
        $region69: #{tpu_custom_call.1} parent=67 // pred_check
          %p830 = pneg %p223
        $region70: #{tpu_custom_call.1} parent=67 // pred_check_branch
          %832 = sbr.rel (%p830) target = $region72
        $region71: #{tpu_custom_call.1} parent=67 // pred_region
          %s833 = sand.u32 %s208, 1
          %s834 = scalar_lea.sflag [#allocation4], %s833
          %s835 = sand.u32 %s208, 1
          %s836 = smul.addr %s835, 64
          %s837 = scalar_lea.vmem [#allocation7], %s836
          %838 = dma.done %s834, 1024
        $region72: #{tpu_custom_call.1} parent=67 // pred_fallthru
          _
      $region68: #{tpu_custom_call.1} parent=5 // pred_fallthru
        _
    $region6: #{tpu_custom_call.1} parent=1 // loop_footer
      %s25 = sadd.s32 1, %s21
    $region7: #{tpu_custom_call.1} parent=1 // loop_footer_branch
      %20 = sbr.rel target = $region3
    $region8: #{tpu_custom_call.1} parent=1 // loop_exit
      _
    %839 = vsyncpa [#allocation3], 1
    %s840 = scalar_lea.sflag [#allocation3], 1
    %841 = vsyncpa %s840, 1
    %842 = vsyncpa [#allocation4], 1
    %s843 = scalar_lea.sflag [#allocation4], 1
    %844 = vsyncpa %s843, 1
    %845 = vsyncpa [#allocation5], 1
    %s846 = scalar_lea.sflag [#allocation5], 1
    %847 = vsyncpa %s846, 1

</llo_original>
